<compile_context>
chip_gen: v6e
topology: v6e:2x2x1
jax: 0.10.0
libtpu: 0.0.40
codegen_flags: <defaults>
</compile_context>

<pallas_src>
import jax
import jax.numpy as jnp
from jax.experimental import pallas as pl
from jax.experimental.pallas import tpu as pltpu


def _pooler_kernel(x_ref, w_ref, b_ref, o_ref):
    # x_ref: (TM, K) storage dtype (f32) -> cast to MXU dtype in-kernel
    # w_ref: (K, TN) compute dtype (bf16), pre-transposed (in, out) layout
    # b_ref: (1, TN) f32
    # o_ref: (TM, TN) output dtype
    x = x_ref[...].astype(w_ref.dtype)
    y = jax.lax.dot_general(
        x, w_ref[...],
        dimension_numbers=(((1,), (0,)), ((), ())),   # plain (M,K)x(K,N)
        preferred_element_type=jnp.float32,
    )
    y = y + b_ref[...]                                # f32 bias broadcast
    # TODO(synk): bf16 tanh roughly doubles EUP throughput on v6e/v7x; kept
    # f32 so the epilogue is exact on every generation (no bf16 EUP on v5e).
    o_ref[...] = jnp.tanh(y).astype(o_ref.dtype)


def _round_up(v, m):
    return ((v + m - 1) // m) * m


def _vmem_capacity_bytes():
    try:
        return int(pltpu.get_tpu_info().vmem_capacity_bytes)
    except Exception:
        return 64 << 20   # conservative: v7x per-TensorCore capacity


def _choose_tm(batch, max_tm=512):
    # Round batch to 16 (bf16 sublane packing), then pick the tile from
    # {512,256,128} that minimizes padding; small batches use a single tile.
    bp16 = _round_up(batch, 16)
    if bp16 <= max_tm:
        return bp16
    best_tm, best_pad = 128, None
    for tm in (512, 256, 128):
        pad = _round_up(bp16, tm) - bp16
        if best_pad is None or pad < best_pad:
            best_tm, best_pad = tm, pad
    return best_tm


def _pick_tn(h):
    # Lane-dense output tile: largest of 512/256/128 dividing H, else full H.
    for c in (512, 256, 128):
        if h >= c and h % c == 0:
            return c
    return h


def prepare_pooler_params(weight, bias, compute_dtype=jnp.bfloat16):
    """One-time parameter prep (NOT per forward call).

    Transposes the PyTorch (out_features, in_features) weight to (in, out)
    so the kernel contracts (1,)x(0,) with no in-kernel transpose, and casts
    it to the MXU compute dtype once.
    """
    w_t = jnp.asarray(weight).T.astype(compute_dtype)          # (K, N)
    b2 = jnp.asarray(bias).reshape(1, -1).astype(jnp.float32)  # (1, N)
    return w_t, b2


@jax.jit
def pooler_forward(x, w_t, bias2d):
    """tanh(x @ W.T + b), with W supplied pre-transposed as w_t = W.T (K, N)."""
    B, K = x.shape
    Kw, N = w_t.shape
    assert K == Kw, "weight/input hidden-size mismatch"
    out_dtype = x.dtype
    x_bytes = jnp.dtype(x.dtype).itemsize
    w_bytes = jnp.dtype(w_t.dtype).itemsize
    o_bytes = jnp.dtype(out_dtype).itemsize

    vmem_cap = _vmem_capacity_bytes()
    budget = int(0.75 * vmem_cap)

    w_resident_bytes = K * N * w_bytes + N * 4            # weight + bias, once
    per_row_pipe = 2 * K * x_bytes + 2 * N * o_bytes      # 2x-buffered x + out

    tm = _choose_tm(B)
    # Shrink the batch tile if the weight-resident footprint would not fit.
    while tm > 128 and w_resident_bytes + tm * per_row_pipe > budget:
        tm = max(128, tm // 2)
    resident = (w_resident_bytes + tm * per_row_pipe) <= budget

    bp = _round_up(B, tm)
    if bp != B:
        x = jnp.pad(x, ((0, bp - B), (0, 0)))

    if resident:
        # Weight + bias fetched once (constant block index); only lane-dense
        # (tm, H) x / out row slabs stream. 1-D grid over batch tiles keeps
        # batch as the (only) "parallel" axis for v7x megacore sharding.
        needed = w_resident_bytes + tm * per_row_pipe
        cp = dict(dimension_semantics=("parallel",))
        if needed > (30 << 20):
            cp["vmem_limit_bytes"] = min(int(needed * 1.15) + (1 << 20), vmem_cap)
        out = pl.pallas_call(
            _pooler_kernel,
            out_shape=jax.ShapeDtypeStruct((bp, N), out_dtype),
            grid=(bp // tm,),
            in_specs=[
                pl.BlockSpec((tm, K), lambda i: (i, 0)),    # x row slab
                pl.BlockSpec((K, N), lambda i: (0, 0)),     # W: fetched once
                pl.BlockSpec((1, N), lambda i: (0, 0)),     # bias: fetched once
            ],
            out_specs=pl.BlockSpec((tm, N), lambda i: (i, 0)),
            compiler_params=pltpu.CompilerParams(**cp),
        )(x, w_t, bias2d)
    else:
        # Streaming fallback (W does not fit VMEM). Choose the loop order
        # that minimizes re-streamed HBM bytes (weight- vs x-stationary).
        tn = _pick_tn(N)
        ni, nj = bp // tm, N // tn
        w_restream = ni * K * N * w_bytes      # batch-outer: W refetched per i
        x_restream = nj * bp * K * x_bytes     # N-outer: x refetched per j
        needed = 2 * (tm * K * x_bytes + K * tn * w_bytes + tm * tn * o_bytes) + N * 4
        cp = dict(dimension_semantics=("parallel", "parallel"))
        if needed > (30 << 20):
            cp["vmem_limit_bytes"] = min(int(needed * 1.15) + (1 << 20), vmem_cap)
        if w_restream <= x_restream:
            grid = (ni, nj)
            in_specs = [
                pl.BlockSpec((tm, K), lambda i, j: (i, 0)),
                pl.BlockSpec((K, tn), lambda i, j: (0, j)),
                pl.BlockSpec((1, tn), lambda i, j: (0, j)),
            ]
            out_spec = pl.BlockSpec((tm, tn), lambda i, j: (i, j))
        else:
            grid = (nj, ni)
            in_specs = [
                pl.BlockSpec((tm, K), lambda j, i: (i, 0)),
                pl.BlockSpec((K, tn), lambda j, i: (0, j)),
                pl.BlockSpec((1, tn), lambda j, i: (0, j)),
            ]
            out_spec = pl.BlockSpec((tm, tn), lambda j, i: (i, j))
        out = pl.pallas_call(
            _pooler_kernel,
            out_shape=jax.ShapeDtypeStruct((bp, N), out_dtype),
            grid=grid,
            in_specs=in_specs,
            out_specs=out_spec,
            compiler_params=pltpu.CompilerParams(**cp),
        )(x, w_t, bias2d)

    if bp != B:
        out = out[:B]
    return out


def _xavier_normal(key, out_features, in_features, dtype=jnp.float32):
    # matches torch.nn.init.xavier_normal_ for an (out, in) Linear weight
    std = (2.0 / (in_features + out_features)) ** 0.5
    return std * jax.random.normal(key, (out_features, in_features), dtype)


def _reference(x, w_t, bias2d):
    # Identical-math reference (bf16 operands, f32 accumulation/bias/tanh).
    y = jax.lax.dot_general(
        x.astype(w_t.dtype), w_t,
        dimension_numbers=(((1,), (0,)), ((), ())),
        preferred_element_type=jnp.float32,
    )
    return jnp.tanh(y + bias2d).astype(x.dtype)


if __name__ == "__main__":
    key = jax.random.PRNGKey(0)

    # (B, H): small case matching the module, plus a larger case exercising
    # batch-tile selection / padding and the resident-weight path.
    for B, H in [(8, 32), (384, 256)]:
        k_x, k_w, key = jax.random.split(key, 3)
        x = jax.random.normal(k_x, (B, H), dtype=jnp.float32)
        weight = _xavier_normal(k_w, H, H)            # nn.Linear (out, in)
        bias = jnp.zeros((H,), dtype=jnp.float32)     # bias.data.fill_(0.0)

        w_t, b2 = prepare_pooler_params(weight, bias)  # one-time param prep
        out = jax.block_until_ready(pooler_forward(x, w_t, b2))

        ref = _reference(x, w_t, b2)                   # identical-math check
        ref_f32 = jnp.tanh(x @ weight.T + bias)        # full-f32 sanity check

        assert out.shape == (B, H)
        assert jnp.allclose(out, ref, atol=1e-5, rtol=1e-5)
        assert jnp.allclose(out, ref_f32, atol=3e-2, rtol=3e-2)

    print("KERNEL_OK")
</pallas_src>

<mosaic_0001>
module attributes {stable_mosaic.version = 11 : i64} {
  func.func @_pooler_kernel(%arg0: i32, %arg1: memref<16x32xf32, #tpu.memory_space<vmem>>, %arg2: memref<32x32xbf16, #tpu.memory_space<vmem>>, %arg3: memref<1x32xf32, #tpu.memory_space<vmem>>, %arg4: memref<16x32xf32, #tpu.memory_space<vmem>>) attributes {dimension_semantics = [#tpu.dimension_semantics<parallel>], iteration_bounds = array<i64: 1>, scalar_prefetch = 0 : i64, scratch_operands = 0 : i64, tpu.core_type = #tpu.core_type<tc>, window_params = [{transform_indices = @transform_0, window_bounds = array<i64: 16, 32>}, {pipeline_mode = #tpu.pipeline_mode<synchronous>, transform_indices = @transform_1, window_bounds = array<i64: 32, 32>}, {pipeline_mode = #tpu.pipeline_mode<synchronous>, transform_indices = @transform_2, window_bounds = array<i64: 1, 32>}, {transform_indices = @transform_3, window_bounds = array<i64: 16, 32>}]} {
    %c0 = arith.constant 0 : index
    %c0_0 = arith.constant 0 : index
    %0 = vector.load %arg1[%c0, %c0_0] : memref<16x32xf32, #tpu.memory_space<vmem>>, vector<16x32xf32>
    %1 = arith.truncf %0 : vector<16x32xf32> to vector<16x32xbf16>
    %c0_1 = arith.constant 0 : index
    %c0_2 = arith.constant 0 : index
    %2 = vector.load %arg2[%c0_1, %c0_2] : memref<32x32xbf16, #tpu.memory_space<vmem>>, vector<32x32xbf16>
    %cst = arith.constant dense<0.000000e+00> : vector<16x32xf32>
    %3 = tpu.matmul %1, %2, %cst {dimension_numbers = #tpu.dot_dimension_numbers<[1], [0], [0], [1], [0, 0, 1, 1], [], []>} : vector<16x32xbf16>, vector<32x32xbf16>, vector<16x32xf32> -> vector<16x32xf32>
    %c0_3 = arith.constant 0 : index
    %c0_4 = arith.constant 0 : index
    %4 = vector.load %arg3[%c0_3, %c0_4] : memref<1x32xf32, #tpu.memory_space<vmem>>, vector<1x32xf32>
    %5 = vector.broadcast %4 : vector<1x32xf32> to vector<16x32xf32>
    %6 = arith.addf %3, %5 : vector<16x32xf32>
    %7 = math.tanh %6 : vector<16x32xf32>
    %c0_5 = arith.constant 0 : index
    %c0_6 = arith.constant 0 : index
    %8 = vector.load %arg4[%c0_5, %c0_6] : memref<16x32xf32, #tpu.memory_space<vmem>>, vector<16x32xf32>
    tpu.vector_store %arg4[%c0_5, %c0_6], %7 {strides = array<i32>} : memref<16x32xf32, #tpu.memory_space<vmem>>, vector<16x32xf32>,
    return
  }
  func.func @transform_0(%arg0: i32) -> (i32, i32) {
    %c0_i32 = arith.constant 0 : i32
    %c0_i32_0 = arith.constant 0 : i32
    return %arg0, %c0_i32 : i32, i32
  }
  func.func @transform_1(%arg0: i32) -> (i32, i32) {
    %c0_i32 = arith.constant 0 : i32
    %c0_i32_0 = arith.constant 0 : i32
    %c0_i32_1 = arith.constant 0 : i32
    return %c0_i32, %c0_i32_0 : i32, i32
  }
  func.func @transform_2(%arg0: i32) -> (i32, i32) {
    %c0_i32 = arith.constant 0 : i32
    %c0_i32_0 = arith.constant 0 : i32
    %c0_i32_1 = arith.constant 0 : i32
    return %c0_i32, %c0_i32_0 : i32, i32
  }
  func.func @transform_3(%arg0: i32) -> (i32, i32) {
    %c0_i32 = arith.constant 0 : i32
    %c0_i32_0 = arith.constant 0 : i32
    return %arg0, %c0_i32 : i32, i32
  }
}

</mosaic_0001>

<llo_original>
// kernel: pooler_forward.1
$region0: #{pooler_forward.1}
  #allocation0 [shape = 'u32[]', space=smem, size = 0x4, offset = 0x4, fixed_abs, tag = 'smem constant byte address 0x4 - core index']
  #allocation1 [shape = 'u32[144,128]{1,0:T(1,128)}', space=vmem, size = 0x12000, scoped, tag = 'internal scratch']
  %s0 = inlined_call_operand.vmem [shape: f32[16,32], index: 0, kind: input, shape index: {}]
  %s1 = inlined_call_operand.vmem [shape: bf16[32,32], index: 1, kind: input, shape index: {}]
  %s2 = inlined_call_operand.vmem [shape: f32[1,32], index: 2, kind: input, shape index: {}]
  %s3 = inlined_call_operand.vmem [shape: f32[16,32], index: 3, kind: output, shape index: {}]
  %s4 = sld [smem:[#allocation0]]
  $region22: #{pooler_forward.1} parent=0
    _
  %s6 = ssub.s32 1, %s4
  %s7 = scalar_select 0, %s6, %s4
  // Predicated region
  $region2: #{pooler_forward.1} parent=0 // pred_check
    _
  $region3: #{pooler_forward.1} parent=0 // pred_check_branch
    %9 = sbr.rel (0) target = $region5
  $region4: #{pooler_forward.1} parent=0 // pred_region
    _
  $region5: #{pooler_forward.1} parent=0 // pred_fallthru
    _
  // Predicated region
  $region6: #{pooler_forward.1} parent=0 // pred_check
    _
  $region7: #{pooler_forward.1} parent=0 // pred_check_branch
    %11 = sbr.rel (0) target = $region9
  $region8: #{pooler_forward.1} parent=0 // pred_region
    _
  $region9: #{pooler_forward.1} parent=0 // pred_fallthru
    _
  // Predicated region
  $region10: #{pooler_forward.1} parent=0 // pred_check
    _
  $region11: #{pooler_forward.1} parent=0 // pred_check_branch
    %13 = sbr.rel (0) target = $region13
  $region12: #{pooler_forward.1} parent=0 // pred_region
    _
  $region13: #{pooler_forward.1} parent=0 // pred_fallthru
    _
  %v15 = vld [vmem:[%s0] sm:$0xff]
  %v16 = vld [vmem:[%s0 + $0x8] sm:$0xff]
  %v17 = vpack.c.bf16 %v16, %v15
  %v18 = vld [vmem:[%s1] sm:$0xf]
  %v19 = vld [vmem:[%s1 + $0x4] sm:$0xf]
  %v20 = vld [vmem:[%s1 + $0x8] sm:$0xf]
  %v21 = vld [vmem:[%s1 + $0xc] sm:$0xf]
  %v22 = vld [vmem:[%s2] sm:$0x1]
  %v24 = vlaneseq
  %v25 = vshrl.u32 %v24, 7
  %v26 = vsub.s32 0, %v25
  %v27 = vrot.slane %v22, %v26
  %v33 = vunpack.c.l.b16 %v18
  %v34 = vunpack.c.l.b16 %v19
  %v35 = vunpack.c.l.b16 %v20
  %v36 = vunpack.c.l.b16 %v21
  %v37 = vpack.c.b16 %v34, %v33
  %v38 = vpack.c.b16 %v36, %v35
  %vm41 = vcmask 261120
  %v43 = vsel %vm41, %v17, 0
  %45 = vmatprep.subr.bf16.mxu0 0
  %46 = vmatpush1.bf16.msra.mxu0 0
  %47 = vmatprep.subr.bf16.mxu0 0
  %48 = vmatpush1.bf16.msra.mxu0 0
  %49 = vmatprep.subr.bf16.mxu0 0
  %50 = vmatpush1.bf16.msra.mxu0 0
  %51 = vmatprep.subr.bf16.mxu0 0
  %52 = vmatpush1.bf16.msra.mxu0 0
  %53 = vmatprep.subr.bf16.mxu0 0
  %54 = vmatpush1.bf16.msra.mxu0 0
  %55 = vmatprep.subr.bf16.mxu0 0
  %56 = vmatpush1.bf16.msra.mxu0 0
  %57 = vmatprep.subr.bf16.mxu0 0
  %58 = vmatpush1.bf16.msra.mxu0 %v38
  %59 = vmatprep.subr.bf16.mxu0 0
  %60 = vmatpush1.bf16.msra.mxu0 %v37
  %61 = vmatprep.subr.bf16.mxu0 0
  %62 = vmatpush2.bf16.msra.mxu0 0
  %63 = vmatprep.subr.bf16.mxu0 0
  %64 = vmatpush2.bf16.msra.mxu0 0
  %65 = vmatprep.subr.bf16.mxu0 0
  %66 = vmatpush2.bf16.msra.mxu0 0
  %67 = vmatprep.subr.bf16.mxu0 0
  %68 = vmatpush2.bf16.msra.mxu0 0
  %69 = vmatprep.subr.bf16.mxu0 0
  %70 = vmatpush2.bf16.msra.mxu0 0
  %71 = vmatprep.subr.bf16.mxu0 0
  %72 = vmatpush2.bf16.msra.mxu0 0
  %73 = vmatprep.subr.bf16.mxu0 0
  %74 = vmatpush2.bf16.msra.mxu0 0
  %75 = vmatprep.subr.bf16.mxu0 0
  %76 = vmatpush2.bf16.msra.mxu0 0
  %77 = vmatprep.mubr.bf16.mxu0 0
  %78 = vmatmul.mubr.bf16.gmra.mxu0 %v43
  %v79 = vpop.f32.mrf.mxu0
  %v80 = vadd.f32 %v27, %v79
  %v81 = vpop.f32.mrf.mxu0
  %v82 = vpop.f32.mrf.mxu0
  %v83 = vadd.f32 %v27, %v82
  %v84 = vpop.f32.mrf.mxu0
  %85 = vdwg.mxu0
  %v86 = vtanh.pop %v80
  %v87 = vtanh.pop %v83
  %88 = vst.msk [vmem:[%s3] sm:$0xff] %vm41, %v86
  %89 = vst.msk [vmem:[%s3 + $0x8] sm:$0xff] %vm41, %v87
  // Predicated region
  $region14: #{pooler_forward.1} parent=0 // pred_check
    _
  $region15: #{pooler_forward.1} parent=0 // pred_check_branch
    %91 = sbr.rel (0) target = $region17
  $region16: #{pooler_forward.1} parent=0 // pred_region
    _
  $region17: #{pooler_forward.1} parent=0 // pred_fallthru
    _
  // Predicated region
  $region18: #{pooler_forward.1} parent=0 // pred_check
    _
  $region19: #{pooler_forward.1} parent=0 // pred_check_branch
    %93 = sbr.rel (0) target = $region21
  $region20: #{pooler_forward.1} parent=0 // pred_region
    _
  $region21: #{pooler_forward.1} parent=0 // pred_fallthru
    _

</llo_original>
